<compile_context>
chip_gen: v5e
topology: v5e:2x2
jax: 0.10.0
libtpu: 0.0.40
codegen_flags: <defaults>
</compile_context>

<pallas_src>
import jax
import jax.numpy as jnp
from jax.experimental import pallas as pl
from jax.experimental.pallas import tpu as pltpu


def _bsconvu_kernel(x3_ref, m_ref, b_ref, o_ref):
    # x3_ref: (Nb, H, 3*W*Cin)   vertically im2col'ed input, lane-dense (MXU dtype)
    # m_ref : (3*W*Cin, W*Cout)  fused pointwise*depthwise matrix (MXU dtype)
    # b_ref : (1, W*Cout)        depthwise bias tiled across W (f32)
    # o_ref : (Nb, H, W*Cout)    lane-dense output (f32)
    nb, h, k = x3_ref.shape
    wcout = o_ref.shape[2]

    x = x3_ref[...].reshape(nb * h, k)          # fold batch into the MXU M dimension
    acc = jnp.dot(x, m_ref[...], preferred_element_type=jnp.float32)   # (Nb*H, W*Cout) f32
    acc = acc + b_ref[...]                      # (1, W*Cout) broadcasts over all rows
    o_ref[...] = acc.reshape(nb, h, wcout).astype(o_ref.dtype)


def bsconvu_pallas(x_nhwc, pw_w, dw_w, bias, *, mxu_dtype=jnp.bfloat16,
                   max_rows_per_block=128):
    """BSConvU forward.

    x_nhwc: (N, H, W, Cin); pw_w: (Cin, Cout); dw_w: (3, 3, Cout); bias: (Cout,).
    Returns (N, H, W, Cout) in x_nhwc.dtype.
    """
    N, H, W, Cin = x_nhwc.shape
    Cout = pw_w.shape[1]
    wcin, wcout = W * Cin, W * Cout
    f32 = jnp.float32

    # ---- wrapper-side layout plumbing (few-KiB tensors, pure relayout) --------------------
    x_flat = x_nhwc.reshape(N, H, wcin)                              # lane-dense view (free)
    zero_row = jnp.zeros((N, 1, wcin), x_flat.dtype)
    x_up = jnp.concatenate([zero_row, x_flat[:, :-1]], axis=1)       # x[h-1] (zero at h=0)
    x_dn = jnp.concatenate([x_flat[:, 1:], zero_row], axis=1)        # x[h+1] (zero at h=H-1)
    x3 = jnp.concatenate([x_up, x_flat, x_dn], axis=2)               # (N, H, 3*W*Cin)

    # Fused pointwise x depthwise matrix:
    #   M_full[di*W*Cin + w'*Cin + ci, w*Cout + co] = pw[ci,co] * dw[di, w'-w+1, co], |w'-w|<=1
    blocks = []
    for di in range(3):
        blk = jnp.zeros((wcin, wcout), f32)
        for dj in range(3):
            shift = jnp.kron(jnp.eye(W, k=1 - dj, dtype=f32), pw_w.astype(f32))  # (wcin, wcout)
            blk = blk + shift * jnp.tile(dw_w[di, dj].astype(f32), (W,))[None, :]
        blocks.append(blk)
    m_full = jnp.concatenate(blocks, axis=0)                         # (3*W*Cin, W*Cout)

    bias_flat = jnp.tile(bias.astype(f32).reshape(1, Cout), (1, W))  # (1, W*Cout)

    x3 = x3.astype(mxu_dtype)
    m_full = m_full.astype(mxu_dtype)

    # ---- grid: fold batch into blocks; keep >= 2 parallel blocks for v7x's 2 TCs ----------
    nb = max(1, min(N, max_rows_per_block // H))   # cap M rows/block (vreg pressure)
    while nb > 1 and pl.cdiv(N, nb) < 2:           # leave work for the second TensorCore
        nb -= 1
    while N % nb != 0:                             # keep the grid exact (no ragged tail)
        nb -= 1
    grid = (N // nb,)

    out_flat = pl.pallas_call(
        _bsconvu_kernel,
        out_shape=jax.ShapeDtypeStruct((N, H, wcout), x_nhwc.dtype),
        grid_spec=pltpu.PrefetchScalarGridSpec(
            num_scalar_prefetch=0,
            grid=grid,
            in_specs=[
                pl.BlockSpec((nb, H, 3 * wcin), lambda n: (n, 0, 0)),
                pl.BlockSpec((3 * wcin, wcout), lambda n: (0, 0)),
                pl.BlockSpec((1, wcout), lambda n: (0, 0)),
            ],
            out_specs=pl.BlockSpec((nb, H, wcout), lambda n: (n, 0, 0)),
        ),
        compiler_params=pltpu.CompilerParams(
            dimension_semantics=("parallel",),
        ),
    )(x3, m_full, bias_flat)

    return out_flat.reshape(N, H, W, Cout)


def bsconvu_reference(x_nhwc, pw_w, dw_w, bias):
    """Pure-JAX reference (lax conv, highest precision) for correctness checking."""
    Cout = pw_w.shape[1]
    mid = jax.lax.conv_general_dilated(
        x_nhwc, pw_w.reshape(1, 1, *pw_w.shape),
        window_strides=(1, 1), padding="VALID",
        dimension_numbers=("NHWC", "HWIO", "NHWC"),
        precision=jax.lax.Precision.HIGHEST)
    dw_hwio = dw_w.reshape(3, 3, 1, Cout)
    out = jax.lax.conv_general_dilated(
        mid, dw_hwio, window_strides=(1, 1), padding=((1, 1), (1, 1)),
        dimension_numbers=("NHWC", "HWIO", "NHWC"),
        feature_group_count=Cout,
        precision=jax.lax.Precision.HIGHEST)
    return out + bias.reshape(1, 1, 1, Cout)


if __name__ == "__main__":
    # Module config (matches BSConvU(in_channels=4, out_channels=8))
    N, Cin, Cout, H, W = 2, 4, 8, 16, 16

    key = jax.random.PRNGKey(0)
    k_x, k_pw, k_dw, k_b = jax.random.split(key, 4)

    # Input in the PyTorch NCHW convention.
    x_nchw = jax.random.normal(k_x, (N, Cin, H, W), jnp.float32)

    # Deterministic parameter init (PyTorch param shapes, then converted).
    pw_weight = jax.random.normal(k_pw, (Cout, Cin, 1, 1), jnp.float32) * 0.1   # Conv2d(Cin->Cout, 1x1)
    dw_weight = jax.random.normal(k_dw, (Cout, 1, 3, 3), jnp.float32) * 0.1     # Conv2d(Cout->Cout, 3x3, groups=Cout)
    dw_bias = jax.random.normal(k_b, (Cout,), jnp.float32) * 0.1

    # Convert to kernel layouts.
    x_nhwc = jnp.transpose(x_nchw, (0, 2, 3, 1))                  # NCHW -> NHWC
    pw_w = jnp.transpose(pw_weight[:, :, 0, 0], (1, 0))           # (Cin, Cout)
    dw_w = jnp.transpose(dw_weight[:, 0, :, :], (1, 2, 0))        # (3, 3, Cout)

    ref_nhwc = bsconvu_reference(x_nhwc, pw_w, dw_w, dw_bias)

    # f32 MXU-operand path: tight numerical check.
    out_f32 = bsconvu_pallas(x_nhwc, pw_w, dw_w, dw_bias, mxu_dtype=jnp.float32)
    jax.block_until_ready(out_f32)
    assert out_f32.shape == (N, H, W, Cout)
    assert jnp.allclose(out_f32, ref_nhwc, atol=2e-3, rtol=2e-3), "f32 path mismatch vs reference"

    # bf16 MXU-operand path (perf default on v5e/v6e/v7x, f32 accumulation): looser tolerance
    # because the matmul inputs lose mantissa bits (flagged in the review).
    out_bf16 = bsconvu_pallas(x_nhwc, pw_w, dw_w, dw_bias, mxu_dtype=jnp.bfloat16)
    jax.block_until_ready(out_bf16)
    assert out_bf16.shape == (N, H, W, Cout)
    assert jnp.allclose(out_bf16, ref_nhwc, atol=2e-2, rtol=2e-2), "bf16 path mismatch vs reference"

    print("KERNEL_OK")
</pallas_src>

<mosaic_0001>
module attributes {stable_mosaic.version = 11 : i64} {
  func.func @_bsconvu_kernel(%arg0: i32, %arg1: memref<1x16x192xf32, #tpu.memory_space<vmem>>, %arg2: memref<192x128xf32, #tpu.memory_space<vmem>>, %arg3: memref<1x128xf32, #tpu.memory_space<vmem>>, %arg4: memref<1x16x128xf32, #tpu.memory_space<vmem>>) attributes {dimension_semantics = [#tpu.dimension_semantics<parallel>], iteration_bounds = array<i64: 2>, scalar_prefetch = 0 : i64, scratch_operands = 0 : i64, tpu.core_type = #tpu.core_type<tc>, window_params = [{transform_indices = @transform_0, window_bounds = array<i64: 1, 16, 192>}, {pipeline_mode = #tpu.pipeline_mode<synchronous>, transform_indices = @transform_1, window_bounds = array<i64: 192, 128>}, {pipeline_mode = #tpu.pipeline_mode<synchronous>, transform_indices = @transform_2, window_bounds = array<i64: 1, 128>}, {transform_indices = @transform_3, window_bounds = array<i64: 1, 16, 128>}]} {
    %c0 = arith.constant 0 : index
    %c0_0 = arith.constant 0 : index
    %c0_1 = arith.constant 0 : index
    %0 = vector.load %arg1[%c0, %c0_0, %c0_1] : memref<1x16x192xf32, #tpu.memory_space<vmem>>, vector<1x16x192xf32>
    %1 = vector.shape_cast %0 : vector<1x16x192xf32> to vector<16x192xf32>
    %c0_2 = arith.constant 0 : index
    %c0_3 = arith.constant 0 : index
    %2 = vector.load %arg2[%c0_2, %c0_3] : memref<192x128xf32, #tpu.memory_space<vmem>>, vector<192x128xf32>
    %cst = arith.constant dense<0.000000e+00> : vector<16x128xf32>
    %3 = tpu.matmul %1, %2, %cst {dimension_numbers = #tpu.dot_dimension_numbers<[1], [0], [0], [1], [0, 0, 1, 1], [], []>} : vector<16x192xf32>, vector<192x128xf32>, vector<16x128xf32> -> vector<16x128xf32>
    %c0_4 = arith.constant 0 : index
    %c0_5 = arith.constant 0 : index
    %4 = vector.load %arg3[%c0_4, %c0_5] : memref<1x128xf32, #tpu.memory_space<vmem>>, vector<1x128xf32>
    %5 = vector.broadcast %4 : vector<1x128xf32> to vector<16x128xf32>
    %6 = arith.addf %3, %5 : vector<16x128xf32>
    %7 = vector.shape_cast %6 : vector<16x128xf32> to vector<1x16x128xf32>
    %c0_6 = arith.constant 0 : index
    %c0_7 = arith.constant 0 : index
    %c0_8 = arith.constant 0 : index
    %8 = vector.load %arg4[%c0_6, %c0_7, %c0_8] : memref<1x16x128xf32, #tpu.memory_space<vmem>>, vector<1x16x128xf32>
    tpu.vector_store %arg4[%c0_6, %c0_7, %c0_8], %7 {strides = array<i32>} : memref<1x16x128xf32, #tpu.memory_space<vmem>>, vector<1x16x128xf32>,
    return
  }
  func.func @transform_0(%arg0: i32) -> (i32, i32, i32) {
    %c0_i32 = arith.constant 0 : i32
    %c0_i32_0 = arith.constant 0 : i32
    %c0_i32_1 = arith.constant 0 : i32
    return %arg0, %c0_i32, %c0_i32_0 : i32, i32, i32
  }
  func.func @transform_1(%arg0: i32) -> (i32, i32) {
    %c0_i32 = arith.constant 0 : i32
    %c0_i32_0 = arith.constant 0 : i32
    %c0_i32_1 = arith.constant 0 : i32
    return %c0_i32, %c0_i32_0 : i32, i32
  }
  func.func @transform_2(%arg0: i32) -> (i32, i32) {
    %c0_i32 = arith.constant 0 : i32
    %c0_i32_0 = arith.constant 0 : i32
    %c0_i32_1 = arith.constant 0 : i32
    return %c0_i32, %c0_i32_0 : i32, i32
  }
  func.func @transform_3(%arg0: i32) -> (i32, i32, i32) {
    %c0_i32 = arith.constant 0 : i32
    %c0_i32_0 = arith.constant 0 : i32
    %c0_i32_1 = arith.constant 0 : i32
    return %arg0, %c0_i32, %c0_i32_0 : i32, i32, i32
  }
}

</mosaic_0001>

<llo_original>
// kernel: tpu_custom_call.1
$region0: #{tpu_custom_call.1}
  #allocation0 [shape = 'u32[]', space=smem, size = 0x4, offset = 0x4, fixed_abs, tag = 'smem constant byte address 0x4 - core index']
  #allocation1 [shape = 'u32[72,128]{1,0:T(1,128)}', space=vmem, size = 0x9000, scoped, tag = 'internal scratch']
  %s0 = inlined_call_operand.hbm [shape: f32[2,16,192], index: 0, kind: input, shape index: {}]
  %s1 = inlined_call_operand.hbm [shape: f32[192,128], index: 1, kind: input, shape index: {}]
  %s2 = inlined_call_operand.vmem [shape: f32[1,128], index: 2, kind: input, shape index: {}]
  %s3 = inlined_call_operand.hbm [shape: f32[2,16,128], index: 3, kind: output, shape index: {}]
  %s4 = sld [smem:[#allocation0]]
  $region53: #{tpu_custom_call.1} parent=0
    _
  %s6 = ssub.s32 1, %s4
  %s7 = scalar_select 0, %s6, %s4
  $region1: #{tpu_custom_call.1} parent=0
    #allocation2 [shape = 'u8[32768]{0}', space=vmem, size = 0x8000, scoped, tag = 'input window, operand 0']
    #allocation3 [shape = 's32[2]{0}', space=sflag, size = 0x8, scoped, tag = 'scoped memory for tpu_custom_call.1']
    #allocation4 [shape = 's32[2]{0}', space=sflag, size = 0x8, scoped, tag = 'scoped memory for tpu_custom_call.1']
    #allocation5 [shape = 'u8[98304]{0}', space=vmem, size = 0x18000, scoped, tag = 'input window, operand 1, single buffered']
    #allocation6 [shape = 's32[1]{0}', space=sflag, size = 0x4, scoped, tag = 'scoped memory for tpu_custom_call.1']
    #allocation7 [shape = 'u8[16384]{0}', space=vmem, size = 0x4000, scoped, tag = 'output window, operand 0']
    %8 = vsyncpa [#allocation3], 0
    %s9 = scalar_lea.sflag [#allocation3], 1
    %10 = vsyncpa %s9, 0
    %11 = vsyncpa [#allocation6], 0
    %12 = vsyncpa [#allocation4], 0
    %s13 = scalar_lea.sflag [#allocation4], 1
    %14 = vsyncpa %s13, 0
    loop: start=0, step=1, limit=4
    $region2: #{tpu_custom_call.1} parent=1 // loop_pre_header
      _
    $region3: #{tpu_custom_call.1} parent=1 // loop_header
      %s16 = sphi 0, %s20
      %p17 = scmp.ge.s32.totalorder %s16, 4
      %s26 = sphi 0, %s28
      %s29 = sphi 0, %s26
      %s30 = sphi 0, %s29
      %s46 = sphi 0, %s30
      %s50 = sphi 0, %s50
      %s52 = sphi 0, %s50
      %s53 = sphi 0, %s52
      %s67 = sphi 0, %s53
      %s71 = sphi 0, %s71
      %s73 = sphi 0, %s71
      %s74 = sphi 0, %s73
      %s88 = sphi 0, %s74
      %s94 = sphi 0, %s96
      %s97 = sphi 0, %s94
      %s98 = sphi 0, %s97
      %s114 = sphi 0, %s98
    $region4: #{tpu_custom_call.1} parent=1 // loop_header_branch
      %19 = sbr.rel (%p17) target = $region8
    $region5: #{tpu_custom_call.1} parent=1 // loop_body
      %s21 = ssub.s32 %s16, 1
      %s22 = ssub.s32 %s16, 2
      %s23 = sadd.s32 %s16, 1
      %s24 = ssub.s32 %s16, %s23
      %p25 = scmp.eq.s32.totalorder %s24, 0
      %s27 = sadd.s32 %s26, 1
      %s28 = scalar_select %p25, %s26, %s27
      %p31 = pneg %p25
      %p32 = scmp.eq.s32.totalorder %s16, 1
      %p33 = por %p31, %p32
      %p34 = scmp.ne.s32.totalorder %s26, %s29
      %p35 = scmp.eq.s32.totalorder %s16, 0
      %p36 = por %p34, %p35
      %p37 = scmp.ne.s32.totalorder %s26, %s29
      %p38 = scmp.eq.s32.totalorder %s21, 1
      %p39 = por %p37, %p38
      %p40 = scmp.ne.s32.totalorder %s29, %s30
      %p41 = scmp.eq.s32.totalorder %s21, 0
      %p42 = por %p40, %p41
      %p43 = scmp.ne.s32.totalorder %s29, %s30
      %p44 = scmp.eq.s32.totalorder %s22, 1
      %p45 = por %p43, %p44
      %p47 = scmp.ne.s32.totalorder %s30, %s46
      %p48 = scmp.eq.s32.totalorder %s22, 0
      %p49 = por %p47, %p48
      %s51 = sadd.s32 %s50, 1
      %p54 = scmp.eq.s32.totalorder %s16, 1
      %p55 = scmp.ne.s32.totalorder %s50, %s52
      %p56 = scmp.eq.s32.totalorder %s16, 0
      %p57 = por %p55, %p56
      %p58 = scmp.ne.s32.totalorder %s50, %s52
      %p59 = scmp.eq.s32.totalorder %s21, 1
      %p60 = por %p58, %p59
      %p61 = scmp.ne.s32.totalorder %s52, %s53
      %p62 = scmp.eq.s32.totalorder %s21, 0
      %p63 = por %p61, %p62
      %p64 = scmp.ne.s32.totalorder %s52, %s53
      %p65 = scmp.eq.s32.totalorder %s22, 1
      %p66 = por %p64, %p65
      %p68 = scmp.ne.s32.totalorder %s53, %s67
      %p69 = scmp.eq.s32.totalorder %s22, 0
      %p70 = por %p68, %p69
      %s72 = sadd.s32 %s71, 1
      %p75 = scmp.eq.s32.totalorder %s16, 1
      %p76 = scmp.ne.s32.totalorder %s71, %s73
      %p77 = scmp.eq.s32.totalorder %s16, 0
      %p78 = por %p76, %p77
      %p79 = scmp.ne.s32.totalorder %s71, %s73
      %p80 = scmp.eq.s32.totalorder %s21, 1
      %p81 = por %p79, %p80
      %p82 = scmp.ne.s32.totalorder %s73, %s74
      %p83 = scmp.eq.s32.totalorder %s21, 0
      %p84 = por %p82, %p83
      %p85 = scmp.ne.s32.totalorder %s73, %s74
      %p86 = scmp.eq.s32.totalorder %s22, 1
      %p87 = por %p85, %p86
      %p89 = scmp.ne.s32.totalorder %s74, %s88
      %p90 = scmp.eq.s32.totalorder %s22, 0
      %p91 = por %p89, %p90
      %s92 = ssub.s32 %s16, %s23
      %p93 = scmp.eq.s32.totalorder %s92, 0
      %s95 = sadd.s32 %s94, 1
      %s96 = scalar_select %p93, %s94, %s95
      %p99 = pneg %p93
      %p100 = scmp.eq.s32.totalorder %s16, 1
      %p101 = por %p99, %p100
      %p102 = scmp.ne.s32.totalorder %s94, %s97
      %p103 = scmp.eq.s32.totalorder %s16, 0
      %p104 = por %p102, %p103
      %p105 = scmp.ne.s32.totalorder %s94, %s97
      %p106 = scmp.eq.s32.totalorder %s21, 1
      %p107 = por %p105, %p106
      %p108 = scmp.ne.s32.totalorder %s97, %s98
      %p109 = scmp.eq.s32.totalorder %s21, 0
      %p110 = por %p108, %p109
      %p111 = scmp.ne.s32.totalorder %s97, %s98
      %p112 = scmp.eq.s32.totalorder %s22, 1
      %p113 = por %p111, %p112
      %p115 = scmp.ne.s32.totalorder %s98, %s114
      %p116 = scmp.eq.s32.totalorder %s22, 0
      %p117 = por %p115, %p116
      %p118 = scmp.le.s32.totalorder 1, %s16
      %p119 = scmp.lt.s32.totalorder %s16, 3
      %p120 = pnand %p118, %p119
      %p121 = pneg %p120
      // Predicated region
      $region9: #{tpu_custom_call.1} parent=5 // pred_check
        _
      $region10: #{tpu_custom_call.1} parent=5 // pred_check_branch
        %123 = sbr.rel (%p120) target = $region12
      $region11: #{tpu_custom_call.1} parent=5 // pred_region
        %s124 = ssub.s32 %s16, 1
        // Predicated region
        $region13: #{tpu_custom_call.1} parent=11 // pred_check
          %p125 = pneg %p63
        $region14: #{tpu_custom_call.1} parent=11 // pred_check_branch
          %127 = sbr.rel (%p125) target = $region16
        $region15: #{tpu_custom_call.1} parent=11 // pred_region
          %129 = vsyncadd [#allocation6], 0
          %s130 = sshll.u32 %s1, 4
          %s131 = int_to_ptr.hbm [resolvable:$true] %s130
          %s132 = sshll.u32 [#allocation5], 4
          %s133 = int_to_ptr.vmem [resolvable:$true] %s132
          %138 = dma.hbm_to_vmem [thread:$0]  %s131, 3072, %s133, [#allocation6], 128, 128, 8
        $region16: #{tpu_custom_call.1} parent=11 // pred_fallthru
          _
        // Predicated region
        $region17: #{tpu_custom_call.1} parent=11 // pred_check
          %p139 = pneg %p84
        $region18: #{tpu_custom_call.1} parent=11 // pred_check_branch
          %141 = sbr.rel (%p139) target = $region20
        $region19: #{tpu_custom_call.1} parent=11 // pred_region
          _
        $region20: #{tpu_custom_call.1} parent=11 // pred_fallthru
          _
      $region12: #{tpu_custom_call.1} parent=5 // pred_fallthru
        _
      %p142 = scmp.lt.s32.totalorder %s16, 2
      // Predicated region
      $region21: #{tpu_custom_call.1} parent=5 // pred_check
        %p143 = pneg %p142
      $region22: #{tpu_custom_call.1} parent=5 // pred_check_branch
        %145 = sbr.rel (%p143) target = $region24
      $region23: #{tpu_custom_call.1} parent=5 // pred_region
        // Predicated region
        $region25: #{tpu_custom_call.1} parent=23 // pred_check
          %p146 = pneg %p36
        $region26: #{tpu_custom_call.1} parent=23 // pred_check_branch
          %148 = sbr.rel (%p146) target = $region28
        $region27: #{tpu_custom_call.1} parent=23 // pred_region
          %s149 = sand.u32 %s26, 1
          %s150 = scalar_lea.sflag [#allocation3], %s149
          %s151 = sand.u32 %s26, 1
          %s152 = smul.addr %s151, 32
          %s153 = scalar_lea.vmem [#allocation2], %s152
          %155 = vsyncadd %s150, 0
          %s156 = smul.addr %s16, 4
          %s157 = smul.addr %s156, 8
          %s158 = scalar_lea.hbm %s0, %s157
          %s159 = sshll.u32 %s158, 4
          %s160 = int_to_ptr.hbm [resolvable:$true] %s159
          %s161 = sshll.u32 %s153, 4
          %s162 = int_to_ptr.vmem [resolvable:$true] %s161
          %167 = dma.hbm_to_vmem [thread:$0]  %s160, 512, %s162, %s150, 256, 256, 16
        $region28: #{tpu_custom_call.1} parent=23 // pred_fallthru
          _
      $region24: #{tpu_custom_call.1} parent=5 // pred_fallthru
        _
      %p168 = scmp.le.s32.totalorder 1, %s16
      %p169 = scmp.lt.s32.totalorder %s16, 3
      %p170 = pnand %p168, %p169
      %p171 = pneg %p170
      // Predicated region
      $region29: #{tpu_custom_call.1} parent=5 // pred_check
        _
      $region30: #{tpu_custom_call.1} parent=5 // pred_check_branch
        %173 = sbr.rel (%p170) target = $region32
      $region31: #{tpu_custom_call.1} parent=5 // pred_region
        %s174 = ssub.s32 %s16, 1
        %s175 = sand.u32 %s29, 1
        %s176 = scalar_lea.sflag [#allocation3], %s175
        %s177 = sand.u32 %s29, 1
        %s178 = smul.addr %s177, 32
        %s179 = scalar_lea.vmem [#allocation2], %s178
        // Predicated region
        $region33: #{tpu_custom_call.1} parent=31 // pred_check
          %p180 = pneg %p42
        $region34: #{tpu_custom_call.1} parent=31 // pred_check_branch
          %182 = sbr.rel (%p180) target = $region36
        $region35: #{tpu_custom_call.1} parent=31 // pred_region
          %184 = dma.done %s176, 512
        $region36: #{tpu_custom_call.1} parent=31 // pred_fallthru
          _
        // Predicated region
        $region37: #{tpu_custom_call.1} parent=31 // pred_check
          %p185 = pneg %p63
        $region38: #{tpu_custom_call.1} parent=31 // pred_check_branch
          %187 = sbr.rel (%p185) target = $region40
        $region39: #{tpu_custom_call.1} parent=31 // pred_region
          %189 = dma.done [#allocation6], 3072
        $region40: #{tpu_custom_call.1} parent=31 // pred_fallthru
          _
        %s190 = sand.u32 %s29, 1
        %s191 = scalar_lea.sflag [#allocation3], %s190
        %s192 = sand.u32 %s29, 1
        %s193 = smul.addr %s192, 32
        %s194 = scalar_lea.vmem [#allocation2], %s193
        %p195 = pneg %p42
        %p196 = pneg %p39
        %p197 = pneg %p63
        %p198 = pneg %p60
        %p199 = pneg %p84
        %p200 = pneg %p81
        %p201 = pneg %p110
        %p202 = pneg %p107
        %s203 = sand.u32 %s97, 1
        %s204 = scalar_lea.sflag [#allocation4], %s203
        %s205 = sand.u32 %s97, 1
        %s206 = smul.addr %s205, 16
        %s207 = scalar_lea.vmem [#allocation7], %s206
        %v208 = vld [vmem:[%s179] sm:$0xff]
        %v209 = vld [vmem:[%s179 + $0x8] sm:$0xff]
        %v210 = vld [vmem:[%s179 + $0x10] sm:$0xff]
        %v211 = vld [vmem:[%s179 + $0x18] sm:$0xff]
        %v212 = vld [vmem:[#allocation5] sm:$0xff]
        %v213 = vld [vmem:[#allocation5 + $0x8] sm:$0xff]
        %v214 = vld [vmem:[#allocation5 + $0x10] sm:$0xff]
        %v215 = vld [vmem:[#allocation5 + $0x18] sm:$0xff]
        %v216 = vld [vmem:[#allocation5 + $0x20] sm:$0xff]
        %v217 = vld [vmem:[#allocation5 + $0x28] sm:$0xff]
        %v218 = vld [vmem:[#allocation5 + $0x30] sm:$0xff]
        %v219 = vld [vmem:[#allocation5 + $0x38] sm:$0xff]
        %v220 = vld [vmem:[#allocation5 + $0x40] sm:$0xff]
        %v221 = vld [vmem:[#allocation5 + $0x48] sm:$0xff]
        %v222 = vld [vmem:[#allocation5 + $0x50] sm:$0xff]
        %v223 = vld [vmem:[#allocation5 + $0x58] sm:$0xff]
        %v224 = vld [vmem:[#allocation5 + $0x60] sm:$0xff]
        %v225 = vld [vmem:[#allocation5 + $0x68] sm:$0xff]
        %v226 = vld [vmem:[#allocation5 + $0x70] sm:$0xff]
        %v227 = vld [vmem:[#allocation5 + $0x78] sm:$0xff]
        %v228 = vld [vmem:[#allocation5 + $0x80] sm:$0xff]
        %v229 = vld [vmem:[#allocation5 + $0x88] sm:$0xff]
        %v230 = vld [vmem:[#allocation5 + $0x90] sm:$0xff]
        %v231 = vld [vmem:[#allocation5 + $0x98] sm:$0xff]
        %v232 = vld [vmem:[#allocation5 + $0xa0] sm:$0xff]
        %v233 = vld [vmem:[#allocation5 + $0xa8] sm:$0xff]
        %v234 = vld [vmem:[#allocation5 + $0xb0] sm:$0xff]
        %v235 = vld [vmem:[#allocation5 + $0xb8] sm:$0xff]
        %v236 = vld [vmem:[%s2] sm:$0x1]
        %v238 = vperm.slane %v236, 0
        %vm240 = vcmask 523264
        %v242 = vsel %vm240, %v209, 0
        %v245 = vsel %vm240, %v211, 0
        %247 = vmatpush.msra.mxu0 %v227
        %248 = vmatpush.msra.mxu0 %v226
        %249 = vmatpush.msra.mxu0 %v225
        %250 = vmatpush.msra.mxu0 %v224
        %251 = vmatpush.msra.mxu0 %v223
        %252 = vmatpush.msra.mxu0 %v222
        %253 = vmatpush.msra.mxu0 %v221
        %254 = vmatpush.msra.mxu0 %v220
        %255 = vmatpush.msra.mxu0 %v219
        %256 = vmatpush.msra.mxu0 %v218
        %257 = vmatpush.msra.mxu0 %v217
        %258 = vmatpush.msra.mxu0 %v216
        %259 = vmatpush.msra.mxu0 %v215
        %260 = vmatpush.msra.mxu0 %v214
        %261 = vmatpush.msra.mxu0 %v213
        %262 = vmatpush.msra.mxu0 %v212
        %263 = vmatmul.f32.gmra.mxu0 %v208
        %v264 = vpop.f32.mrf.mxu0
        %v265 = vadd.f32 %v238, %v264
        %266 = vmatmul.f32.gmra.mxu0 %v210
        %v267 = vpop.f32.mrf.mxu0
        %v268 = vadd.f32 %v238, %v267
        %269 = vdwg.mxu0
        %270 = vmatpush.msra.mxu0 0.0
        %271 = vmatpush.msra.mxu0 0.0
        %272 = vmatpush.msra.mxu0 0.0
        %273 = vmatpush.msra.mxu0 0.0
        %274 = vmatpush.msra.mxu0 0.0
        %275 = vmatpush.msra.mxu0 0.0
        %276 = vmatpush.msra.mxu0 0.0
        %277 = vmatpush.msra.mxu0 0.0
        %278 = vmatpush.msra.mxu0 %v235
        %279 = vmatpush.msra.mxu0 %v234
        %280 = vmatpush.msra.mxu0 %v233
        %281 = vmatpush.msra.mxu0 %v232
        %282 = vmatpush.msra.mxu0 %v231
        %283 = vmatpush.msra.mxu0 %v230
        %284 = vmatpush.msra.mxu0 %v229
        %285 = vmatpush.msra.mxu0 %v228
        %286 = vmatmul.f32.gmra.mxu0 %v242
        %v287 = vpop.f32.mrf.mxu0
        %v288 = vadd.f32 %v265, %v287
        %289 = vmatmul.f32.gmra.mxu0 %v245
        %v290 = vpop.f32.mrf.mxu0
        %v291 = vadd.f32 %v268, %v290
        %292 = vdwg.mxu0
        %293 = vst [vmem:[%s207] sm:$0xff] %v288
        %294 = vst [vmem:[%s207 + $0x8] sm:$0xff] %v291
        %s295 = sand.u32 %s97, 1
        %s296 = scalar_lea.sflag [#allocation4], %s295
        %s297 = sand.u32 %s97, 1
        %s298 = smul.addr %s297, 16
        %s299 = scalar_lea.vmem [#allocation7], %s298
        // Predicated region
        $region41: #{tpu_custom_call.1} parent=31 // pred_check
          %p300 = pneg %p107
        $region42: #{tpu_custom_call.1} parent=31 // pred_check_branch
          %302 = sbr.rel (%p300) target = $region44
        $region43: #{tpu_custom_call.1} parent=31 // pred_region
          %304 = vsyncadd %s296, 0
          %s305 = smul.addr %s21, 2
          %s306 = smul.addr %s305, 8
          %s307 = scalar_lea.hbm %s3, %s306
          %s308 = sshll.u32 %s299, 4
          %s309 = int_to_ptr.vmem [resolvable:$true] %s308
          %s310 = sshll.u32 %s307, 4
          %s311 = int_to_ptr.hbm [resolvable:$true] %s310
          %316 = dma.vmem_to_hbm [thread:$0]  %s309, 256, %s311, %s296, 128, 128, 8
        $region44: #{tpu_custom_call.1} parent=31 // pred_fallthru
          _
      $region32: #{tpu_custom_call.1} parent=5 // pred_fallthru
        _
      %p317 = scmp.le.s32.totalorder 2, %s16
      // Predicated region
      $region45: #{tpu_custom_call.1} parent=5 // pred_check
        %p318 = pneg %p317
      $region46: #{tpu_custom_call.1} parent=5 // pred_check_branch
        %320 = sbr.rel (%p318) target = $region48
      $region47: #{tpu_custom_call.1} parent=5 // pred_region
        %s321 = ssub.s32 %s16, 2
        // Predicated region
        $region49: #{tpu_custom_call.1} parent=47 // pred_check
          %p322 = pneg %p113
        $region50: #{tpu_custom_call.1} parent=47 // pred_check_branch
          %324 = sbr.rel (%p322) target = $region52
        $region51: #{tpu_custom_call.1} parent=47 // pred_region
          %s325 = sand.u32 %s98, 1
          %s326 = scalar_lea.sflag [#allocation4], %s325
          %s327 = sand.u32 %s98, 1
          %s328 = smul.addr %s327, 16
          %s329 = scalar_lea.vmem [#allocation7], %s328
          %331 = dma.done %s326, 256
        $region52: #{tpu_custom_call.1} parent=47 // pred_fallthru
          _
      $region48: #{tpu_custom_call.1} parent=5 // pred_fallthru
        _
    $region6: #{tpu_custom_call.1} parent=1 // loop_footer
      %s20 = sadd.s32 1, %s16
    $region7: #{tpu_custom_call.1} parent=1 // loop_footer_branch
      %15 = sbr.rel target = $region3
    $region8: #{tpu_custom_call.1} parent=1 // loop_exit
      _
    %332 = vsyncpa [#allocation3], 1
    %s333 = scalar_lea.sflag [#allocation3], 1
    %334 = vsyncpa %s333, 1
    %335 = vsyncpa [#allocation6], 1
    %336 = vsyncpa [#allocation4], 1
    %s337 = scalar_lea.sflag [#allocation4], 1
    %338 = vsyncpa %s337, 1

</llo_original>
